<compile_context>
chip_gen: v7x
topology: tpu7x:2x2x1
jax: 0.10.0
libtpu: 0.0.40
codegen_flags: <defaults>
</compile_context>

<pallas_src>
import functools

import jax
import jax.numpy as jnp
from jax.experimental import pallas as pl
from jax.experimental.pallas import tpu as pltpu

LEAKY_SLOPE = 0.01  # PyTorch nn.LeakyReLU default negative_slope


def _round_up(x, m):
    return ((x + m - 1) // m) * m


def _leaky_relu(x):
    # slope < 1  =>  max(x, slope*x) == leaky_relu(x); one VPU mul + max.
    return jnp.maximum(x, LEAKY_SLOPE * x)


def mlp_graph_kernel(x_ref, w1_ref, b1_ref, w2_ref, b2_ref, w3_ref, b3_ref, o_ref):
    """One batch tile [TM, K]; fused 3-layer MLP (Linear->LeakyReLU x2 -> Linear).

    Weights may be bf16 (default); activations are cast to the weight dtype
    just before each dot, accumulation is always f32.
    """
    x = x_ref[...]
    h1 = jnp.dot(x.astype(w1_ref.dtype), w1_ref[...],
                 preferred_element_type=jnp.float32) + b1_ref[...]
    h1 = _leaky_relu(h1)
    h2 = jnp.dot(h1.astype(w2_ref.dtype), w2_ref[...],
                 preferred_element_type=jnp.float32) + b2_ref[...]
    h2 = _leaky_relu(h2)
    out = jnp.dot(h2.astype(w3_ref.dtype), w3_ref[...],
                  preferred_element_type=jnp.float32) + b3_ref[...]
    o_ref[...] = out.astype(o_ref.dtype)


def prepare_params(params, num_nodes, *, has_self_loop=False,
                   param_dtype=jnp.bfloat16):
    """One-time parameter preparation (hoisted out of the forward path).

    - Scatters w1's F rows into a [N*N, 256] matrix at the flat (row-major)
      upper-triangular positions; non-upper-triangular rows are zero, so
      feeding the flattened [B, N*N] node_feature reproduces the PyTorch
      triu gather exactly (jnp.triu_indices and torch.triu_indices share the
      same row-major ascending ordering).
    - Zero-pads the layer-2 hidden dim 32 -> 128 (w2 cols, b2, w3 rows) so h2
      is lane-dense; padded positions stay exactly zero through the MLP.
    - Casts weights to bf16 by default (MXU-native on v5e/v6e/v7x); biases
      stay f32 (added to the f32 accumulator).
    """
    w1, b1, w2, b2, w3, b3 = params
    N = num_nodes
    offset = 0 if has_self_loop else 1
    rows, cols = jnp.triu_indices(N, k=offset)
    flat_idx = rows * N + cols                      # row-major flat positions in [B, N*N]

    K = N * N
    H1 = w1.shape[1]
    H2 = w2.shape[1]
    OUT = w3.shape[1]
    H2p = max(128, _round_up(H2, 128))

    w1_full = jnp.zeros((K, H1), jnp.float32).at[flat_idx, :].set(w1.astype(jnp.float32))
    w2_full = jnp.zeros((H1, H2p), jnp.float32).at[:, :H2].set(w2.astype(jnp.float32))
    b2_full = jnp.zeros((1, H2p), jnp.float32).at[:, :H2].set(b2.reshape(1, H2))
    w3_full = jnp.zeros((H2p, OUT), jnp.float32).at[:H2, :].set(w3.astype(jnp.float32))

    return (
        w1_full.astype(param_dtype),
        b1.reshape(1, H1).astype(jnp.float32),
        w2_full.astype(param_dtype),
        b2_full,
        w3_full.astype(param_dtype),
        b3.reshape(1, OUT).astype(jnp.float32),
    )


def _pick_batch_tile(B, batch_tile):
    """Batch tile: full-extent block for tiny B; otherwise a multiple of 8
    chosen so the grid has at least 2 steps (keeps both v7x TCs busy)."""
    if B <= 16:
        return B                                   # block dim == full array dim -> legal
    half = _round_up(pl.cdiv(B, 2), 8)
    return max(8, min(batch_tile, half))


def mlp_graph_forward(node_feature, prepared, *, batch_tile=1024):
    """node_feature: [B, N, N] (f32 or bf16). Returns [B, out_dim] f32."""
    w1, b1, w2, b2, w3, b3 = prepared
    B, N, _ = node_feature.shape
    K, H1 = w1.shape
    H2p = w2.shape[1]
    OUT = w3.shape[1]
    assert K == N * N, "prepared w1 rows must equal N*N"

    # Flatten [B, N, N] -> [B, N*N]; no gather, no pad (block last dim == K).
    x = node_feature.reshape(B, K)

    TM = _pick_batch_tile(B, batch_tile)
    grid = (pl.cdiv(B, TM),)

    flops = 2 * B * (K * H1 + H1 * H2p + H2p * OUT)
    bytes_accessed = (
        B * K * x.dtype.itemsize
        + sum(int(p.size) * p.dtype.itemsize for p in prepared)
        + B * OUT * 4
    )
    cost = pl.CostEstimate(flops=flops, transcendentals=0,
                           bytes_accessed=bytes_accessed)

    out = pl.pallas_call(
        mlp_graph_kernel,
        out_shape=jax.ShapeDtypeStruct((B, OUT), jnp.float32),
        grid=grid,
        in_specs=[
            pl.BlockSpec((TM, K), lambda i: (i, 0)),     # activations: pipelined over batch
            pl.BlockSpec((K, H1), lambda i: (0, 0)),     # weights/biases: resident in VMEM
            pl.BlockSpec((1, H1), lambda i: (0, 0)),
            pl.BlockSpec((H1, H2p), lambda i: (0, 0)),
            pl.BlockSpec((1, H2p), lambda i: (0, 0)),
            pl.BlockSpec((H2p, OUT), lambda i: (0, 0)),
            pl.BlockSpec((1, OUT), lambda i: (0, 0)),
        ],
        # Narrow (out_dim-wide) output block: legal (== full array dim), and
        # ~64x less HBM writeback than a 128-wide zero-padded slab.
        out_specs=pl.BlockSpec((TM, OUT), lambda i: (i, 0)),
        compiler_params=pltpu.CompilerParams(
            dimension_semantics=("parallel",)),          # batch tiles across v7x's 2 TCs
        cost_estimate=cost,
    )(x, w1, b1, w2, b2, w3, b3)

    return out


def init_params(key, fc_input_dim, out_dim=2):
    """Deterministic init matching nn.Linear shapes: (120->256->32->out_dim)."""
    def linear(k, fan_in, fan_out):
        kw, kb = jax.random.split(k)
        bound = 1.0 / jnp.sqrt(jnp.float32(fan_in))
        w = jax.random.uniform(kw, (fan_in, fan_out), jnp.float32, -bound, bound)
        b = jax.random.uniform(kb, (fan_out,), jnp.float32, -bound, bound)
        return w, b

    k1, k2, k3 = jax.random.split(key, 3)
    w1, b1 = linear(k1, fc_input_dim, 256)
    w2, b2 = linear(k2, 256, 32)
    w3, b3 = linear(k3, 32, out_dim)
    return (w1, b1, w2, b2, w3, b3)


if __name__ == "__main__":
    key = jax.random.PRNGKey(0)
    B, N = 2, 16                       # node_sz = 16
    has_self_loop = False
    F = N * (N - 1) // 2               # 120
    out_dim = 2                        # classification

    k_x, k_ts, k_p = jax.random.split(key, 3)
    node_feature = jax.random.normal(k_x, (B, N, N), jnp.float32)
    time_series = jax.random.normal(k_ts, (B, N, 8), jnp.float32)  # unused by forward
    params = init_params(k_p, F, out_dim)

    # Reference in plain JAX (mirrors the PyTorch forward exactly).
    rows, cols = jnp.triu_indices(N, k=1)
    feat = node_feature[:, rows, cols]
    w1, b1, w2, b2, w3, b3 = params
    h = feat @ w1 + b1
    h = jnp.where(h > 0, h, LEAKY_SLOPE * h)
    h = h @ w2 + b2
    h = jnp.where(h > 0, h, LEAKY_SLOPE * h)
    ref = h @ w3 + b3

    fwd = jax.jit(mlp_graph_forward)

    # Default (bf16-weight) fast path: bf16 matmuls, f32 accumulation.
    prepared_bf16 = prepare_params(params, N, has_self_loop=has_self_loop)
    out_bf16 = jax.block_until_ready(fwd(node_feature, prepared_bf16))
    assert out_bf16.shape == (B, out_dim)
    assert jnp.allclose(out_bf16, ref, atol=1e-1, rtol=5e-2), "bf16 path mismatch"

    # f32-weight path: tight numerical check against the reference.
    prepared_f32 = prepare_params(params, N, has_self_loop=has_self_loop,
                                  param_dtype=jnp.float32)
    out_f32 = jax.block_until_ready(fwd(node_feature, prepared_f32))
    assert out_f32.shape == (B, out_dim)
    assert jnp.allclose(out_f32, ref, atol=1e-4, rtol=1e-4), "f32 path mismatch"

    print("KERNEL_OK")
</pallas_src>

<mosaic_0001>
module attributes {stable_mosaic.version = 11 : i64} {
  func.func @mlp_graph_kernel(%arg0: i32, %arg1: memref<2x256xf32, #tpu.memory_space<vmem>>, %arg2: memref<256x256xbf16, #tpu.memory_space<vmem>>, %arg3: memref<1x256xf32, #tpu.memory_space<vmem>>, %arg4: memref<256x128xbf16, #tpu.memory_space<vmem>>, %arg5: memref<1x128xf32, #tpu.memory_space<vmem>>, %arg6: memref<128x2xbf16, #tpu.memory_space<vmem>>, %arg7: memref<1x2xf32, #tpu.memory_space<vmem>>, %arg8: memref<2x2xf32, #tpu.memory_space<vmem>>) attributes {dimension_semantics = [#tpu.dimension_semantics<parallel>], iteration_bounds = array<i64: 1>, scalar_prefetch = 0 : i64, scratch_operands = 0 : i64, tpu.core_type = #tpu.core_type<tc>, window_params = [{transform_indices = @transform_0, window_bounds = array<i64: 2, 256>}, {pipeline_mode = #tpu.pipeline_mode<synchronous>, transform_indices = @transform_1, window_bounds = array<i64: 256, 256>}, {pipeline_mode = #tpu.pipeline_mode<synchronous>, transform_indices = @transform_2, window_bounds = array<i64: 1, 256>}, {pipeline_mode = #tpu.pipeline_mode<synchronous>, transform_indices = @transform_3, window_bounds = array<i64: 256, 128>}, {pipeline_mode = #tpu.pipeline_mode<synchronous>, transform_indices = @transform_4, window_bounds = array<i64: 1, 128>}, {pipeline_mode = #tpu.pipeline_mode<synchronous>, transform_indices = @transform_5, window_bounds = array<i64: 128, 2>}, {pipeline_mode = #tpu.pipeline_mode<synchronous>, transform_indices = @transform_6, window_bounds = array<i64: 1, 2>}, {transform_indices = @transform_7, window_bounds = array<i64: 2, 2>}]} {
    %c0 = arith.constant 0 : index
    %c0_0 = arith.constant 0 : index
    %0 = vector.load %arg1[%c0, %c0_0] : memref<2x256xf32, #tpu.memory_space<vmem>>, vector<2x256xf32>
    %1 = arith.truncf %0 : vector<2x256xf32> to vector<2x256xbf16>
    %c0_1 = arith.constant 0 : index
    %c0_2 = arith.constant 0 : index
    %2 = vector.load %arg2[%c0_1, %c0_2] : memref<256x256xbf16, #tpu.memory_space<vmem>>, vector<256x256xbf16>
    %cst = arith.constant dense<0.000000e+00> : vector<2x256xf32>
    %3 = tpu.matmul %1, %2, %cst {dimension_numbers = #tpu.dot_dimension_numbers<[1], [0], [0], [1], [0, 0, 1, 1], [], []>} : vector<2x256xbf16>, vector<256x256xbf16>, vector<2x256xf32> -> vector<2x256xf32>
    %c0_3 = arith.constant 0 : index
    %c0_4 = arith.constant 0 : index
    %4 = vector.load %arg3[%c0_3, %c0_4] : memref<1x256xf32, #tpu.memory_space<vmem>>, vector<1x256xf32>
    %5 = vector.broadcast %4 : vector<1x256xf32> to vector<2x256xf32>
    %6 = arith.addf %3, %5 : vector<2x256xf32>
    %cst_5 = arith.constant 0.00999999977 : f32
    %7 = vector.broadcast %cst_5 : f32 to vector<2x256xf32>
    %8 = arith.mulf %7, %6 : vector<2x256xf32>
    %9 = arith.maximumf %6, %8 : vector<2x256xf32>
    %10 = arith.truncf %9 : vector<2x256xf32> to vector<2x256xbf16>
    %c0_6 = arith.constant 0 : index
    %c0_7 = arith.constant 0 : index
    %11 = vector.load %arg4[%c0_6, %c0_7] : memref<256x128xbf16, #tpu.memory_space<vmem>>, vector<256x128xbf16>
    %cst_8 = arith.constant dense<0.000000e+00> : vector<2x128xf32>
    %12 = tpu.matmul %10, %11, %cst_8 {dimension_numbers = #tpu.dot_dimension_numbers<[1], [0], [0], [1], [0, 0, 1, 1], [], []>} : vector<2x256xbf16>, vector<256x128xbf16>, vector<2x128xf32> -> vector<2x128xf32>
    %c0_9 = arith.constant 0 : index
    %c0_10 = arith.constant 0 : index
    %13 = vector.load %arg5[%c0_9, %c0_10] : memref<1x128xf32, #tpu.memory_space<vmem>>, vector<1x128xf32>
    %14 = vector.broadcast %13 : vector<1x128xf32> to vector<2x128xf32>
    %15 = arith.addf %12, %14 : vector<2x128xf32>
    %cst_11 = arith.constant 0.00999999977 : f32
    %16 = vector.broadcast %cst_11 : f32 to vector<2x128xf32>
    %17 = arith.mulf %16, %15 : vector<2x128xf32>
    %18 = arith.maximumf %15, %17 : vector<2x128xf32>
    %19 = arith.truncf %18 : vector<2x128xf32> to vector<2x128xbf16>
    %c0_12 = arith.constant 0 : index
    %c0_13 = arith.constant 0 : index
    %20 = vector.load %arg6[%c0_12, %c0_13] : memref<128x2xbf16, #tpu.memory_space<vmem>>, vector<128x2xbf16>
    %cst_14 = arith.constant dense<0.000000e+00> : vector<2x2xf32>
    %21 = tpu.matmul %19, %20, %cst_14 {dimension_numbers = #tpu.dot_dimension_numbers<[1], [0], [0], [1], [0, 0, 1, 1], [], []>} : vector<2x128xbf16>, vector<128x2xbf16>, vector<2x2xf32> -> vector<2x2xf32>
    %c0_15 = arith.constant 0 : index
    %c0_16 = arith.constant 0 : index
    %22 = vector.load %arg7[%c0_15, %c0_16] : memref<1x2xf32, #tpu.memory_space<vmem>>, vector<1x2xf32>
    %23 = vector.broadcast %22 : vector<1x2xf32> to vector<2x2xf32>
    %24 = arith.addf %21, %23 : vector<2x2xf32>
    %c0_17 = arith.constant 0 : index
    %c0_18 = arith.constant 0 : index
    %25 = vector.load %arg8[%c0_17, %c0_18] : memref<2x2xf32, #tpu.memory_space<vmem>>, vector<2x2xf32>
    tpu.vector_store %arg8[%c0_17, %c0_18], %24 {strides = array<i32>} : memref<2x2xf32, #tpu.memory_space<vmem>>, vector<2x2xf32>,
    return
  }
  func.func @transform_0(%arg0: i32) -> (i32, i32) {
    %c0_i32 = arith.constant 0 : i32
    %c0_i32_0 = arith.constant 0 : i32
    return %arg0, %c0_i32 : i32, i32
  }
  func.func @transform_1(%arg0: i32) -> (i32, i32) {
    %c0_i32 = arith.constant 0 : i32
    %c0_i32_0 = arith.constant 0 : i32
    %c0_i32_1 = arith.constant 0 : i32
    return %c0_i32, %c0_i32_0 : i32, i32
  }
  func.func @transform_2(%arg0: i32) -> (i32, i32) {
    %c0_i32 = arith.constant 0 : i32
    %c0_i32_0 = arith.constant 0 : i32
    %c0_i32_1 = arith.constant 0 : i32
    return %c0_i32, %c0_i32_0 : i32, i32
  }
  func.func @transform_3(%arg0: i32) -> (i32, i32) {
    %c0_i32 = arith.constant 0 : i32
    %c0_i32_0 = arith.constant 0 : i32
    %c0_i32_1 = arith.constant 0 : i32
    return %c0_i32, %c0_i32_0 : i32, i32
  }
  func.func @transform_4(%arg0: i32) -> (i32, i32) {
    %c0_i32 = arith.constant 0 : i32
    %c0_i32_0 = arith.constant 0 : i32
    %c0_i32_1 = arith.constant 0 : i32
    return %c0_i32, %c0_i32_0 : i32, i32
  }
  func.func @transform_5(%arg0: i32) -> (i32, i32) {
    %c0_i32 = arith.constant 0 : i32
    %c0_i32_0 = arith.constant 0 : i32
    %c0_i32_1 = arith.constant 0 : i32
    return %c0_i32, %c0_i32_0 : i32, i32
  }
  func.func @transform_6(%arg0: i32) -> (i32, i32) {
    %c0_i32 = arith.constant 0 : i32
    %c0_i32_0 = arith.constant 0 : i32
    %c0_i32_1 = arith.constant 0 : i32
    return %c0_i32, %c0_i32_0 : i32, i32
  }
  func.func @transform_7(%arg0: i32) -> (i32, i32) {
    %c0_i32 = arith.constant 0 : i32
    %c0_i32_0 = arith.constant 0 : i32
    return %arg0, %c0_i32 : i32, i32
  }
}

</mosaic_0001>

<llo_original>
// kernel: mlp_graph_forward.1
$region0: #{mlp_graph_forward.1}
  #allocation0 [shape = 'u32[]', space=smem, size = 0x4, offset = 0x4, fixed_abs, tag = 'smem constant byte address 0x4 - core index']
  #allocation1 [shape = 'u32[144,128]{1,0:T(1,128)}', space=vmem, size = 0x12000, scoped, tag = 'internal scratch']
  %s0 = inlined_call_operand.vmem [shape: f32[2,256], index: 0, kind: input, shape index: {}]
  %s1 = inlined_call_operand.hbm [shape: bf16[256,256], index: 1, kind: input, shape index: {}]
  %s2 = inlined_call_operand.vmem [shape: f32[1,256], index: 2, kind: input, shape index: {}]
  %s3 = inlined_call_operand.hbm [shape: bf16[256,128], index: 3, kind: input, shape index: {}]
  %s4 = inlined_call_operand.vmem [shape: f32[1,128], index: 4, kind: input, shape index: {}]
  %s5 = inlined_call_operand.vmem [shape: bf16[128,2], index: 5, kind: input, shape index: {}]
  %s6 = inlined_call_operand.vmem [shape: f32[1,2], index: 6, kind: input, shape index: {}]
  %s7 = inlined_call_operand.hbm [shape: f32[2,2], index: 7, kind: output, shape index: {}]
  %s8 = sld [smem:[#allocation0]]
  $region46: #{mlp_graph_forward.1} parent=0
    _
  %s10 = ssub.s32 1, %s8
  %s11 = scalar_select 0, %s10, %s8
  $region1: #{mlp_graph_forward.1} parent=0
    #allocation2 [shape = 'u8[131072]{0}', space=vmem, size = 0x20000, scoped, tag = 'input window, operand 1, single buffered']
    #allocation3 [shape = 's32[1]{0}', space=sflag, size = 0x4, scoped, tag = 'scoped memory for mlp_graph_forward.1']
    #allocation4 [shape = 's32[1]{0}', space=sflag, size = 0x4, scoped, tag = 'scoped memory for mlp_graph_forward.1']
    #allocation5 [shape = 'u8[65536]{0}', space=vmem, size = 0x10000, scoped, tag = 'input window, operand 3, single buffered']
    #allocation6 [shape = 's32[1]{0}', space=sflag, size = 0x4, scoped, tag = 'scoped memory for mlp_graph_forward.1']
    #allocation7 [shape = 'u8[1024]{0}', space=vmem, size = 0x400, scoped, tag = 'output window, operand 0, single buffered']
    %12 = vsyncpa [#allocation3], 0
    %13 = vsyncpa [#allocation6], 0
    %14 = vsyncpa [#allocation4], 0
    // Predicated region
    $region2: #{mlp_graph_forward.1} parent=1 // pred_check
      _
    $region3: #{mlp_graph_forward.1} parent=1 // pred_check_branch
      %16 = sbr.rel (0) target = $region5
    $region4: #{mlp_graph_forward.1} parent=1 // pred_region
      _
    $region5: #{mlp_graph_forward.1} parent=1 // pred_fallthru
      _
    // Predicated region
    $region6: #{mlp_graph_forward.1} parent=1 // pred_check
      _
    $region7: #{mlp_graph_forward.1} parent=1 // pred_check_branch
      %18 = sbr.rel (0) target = $region9
    $region8: #{mlp_graph_forward.1} parent=1 // pred_region
      %s20 = ssub.s32 4096, 4096
      %21 = vsyncadd [#allocation3], %s20
      %s22 = sshll.u32 [#allocation2], 4
      %s23 = int_to_ptr.vmem [resolvable:$true] %s22
      %28 = dma.hbm_to_vmem [thread:$0]  %s1, 4096, %s23, [#allocation3], 128, 128, 8
    $region9: #{mlp_graph_forward.1} parent=1 // pred_fallthru
      _
    // Predicated region
    $region10: #{mlp_graph_forward.1} parent=1 // pred_check
      _
    $region11: #{mlp_graph_forward.1} parent=1 // pred_check_branch
      %30 = sbr.rel (0) target = $region13
    $region12: #{mlp_graph_forward.1} parent=1 // pred_region
      _
    $region13: #{mlp_graph_forward.1} parent=1 // pred_fallthru
      _
    // Predicated region
    $region14: #{mlp_graph_forward.1} parent=1 // pred_check
      _
    $region15: #{mlp_graph_forward.1} parent=1 // pred_check_branch
      %32 = sbr.rel (0) target = $region17
    $region16: #{mlp_graph_forward.1} parent=1 // pred_region
      %s34 = ssub.s32 2048, 2048
      %35 = vsyncadd [#allocation6], %s34
      %s36 = sshll.u32 [#allocation5], 4
      %s37 = int_to_ptr.vmem [resolvable:$true] %s36
      %42 = dma.hbm_to_vmem [thread:$0]  %s3, 2048, %s37, [#allocation6], 64, 64, 4
    $region17: #{mlp_graph_forward.1} parent=1 // pred_fallthru
      _
    // Predicated region
    $region18: #{mlp_graph_forward.1} parent=1 // pred_check
      _
    $region19: #{mlp_graph_forward.1} parent=1 // pred_check_branch
      %44 = sbr.rel (0) target = $region21
    $region20: #{mlp_graph_forward.1} parent=1 // pred_region
      _
    $region21: #{mlp_graph_forward.1} parent=1 // pred_fallthru
      _
    // Predicated region
    $region22: #{mlp_graph_forward.1} parent=1 // pred_check
      _
    $region23: #{mlp_graph_forward.1} parent=1 // pred_check_branch
      %46 = sbr.rel (0) target = $region25
    $region24: #{mlp_graph_forward.1} parent=1 // pred_region
      _
    $region25: #{mlp_graph_forward.1} parent=1 // pred_fallthru
      _
    // Predicated region
    $region26: #{mlp_graph_forward.1} parent=1 // pred_check
      _
    $region27: #{mlp_graph_forward.1} parent=1 // pred_check_branch
      %48 = sbr.rel (0) target = $region29
    $region28: #{mlp_graph_forward.1} parent=1 // pred_region
      _
    $region29: #{mlp_graph_forward.1} parent=1 // pred_fallthru
      _
    // Predicated region
    $region30: #{mlp_graph_forward.1} parent=1 // pred_check
      _
    $region31: #{mlp_graph_forward.1} parent=1 // pred_check_branch
      %50 = sbr.rel (0) target = $region33
    $region32: #{mlp_graph_forward.1} parent=1 // pred_region
      %51 = dma.done [#allocation3], 4096
    $region33: #{mlp_graph_forward.1} parent=1 // pred_fallthru
      _
    // Predicated region
    $region34: #{mlp_graph_forward.1} parent=1 // pred_check
      _
    $region35: #{mlp_graph_forward.1} parent=1 // pred_check_branch
      %53 = sbr.rel (0) target = $region37
    $region36: #{mlp_graph_forward.1} parent=1 // pred_region
      %54 = dma.done [#allocation6], 2048
    $region37: #{mlp_graph_forward.1} parent=1 // pred_fallthru
      _
    %v56 = vld [vmem:[%s0] sm:$0xf]
    %v59 = vunpack.c.l.s4 1983009808
    %v60 = vunpack.c.0.s8 %v59
    %v61 = vlaneseq
    %v62 = vshrl.u32 %v61, 7
    %v63 = vsub.s32 %v60, %v62
    %v64 = vrot.slane %v56, %v63
    %v65 = vcombine.high %v64, %v64
    %v68 = vpack.c.bf16 %v64, %v64
    %v69 = vpack.c.bf16 %v65, %v65
    %v70 = vld [vmem:[#allocation2] sm:$0xff]
    %v71 = vld [vmem:[#allocation2 + $0x8] sm:$0xff]
    %v72 = vld [vmem:[#allocation2 + $0x10] sm:$0xff]
    %v73 = vld [vmem:[#allocation2 + $0x18] sm:$0xff]
    %v74 = vld [vmem:[#allocation2 + $0x20] sm:$0xff]
    %v75 = vld [vmem:[#allocation2 + $0x28] sm:$0xff]
    %v76 = vld [vmem:[#allocation2 + $0x30] sm:$0xff]
    %v77 = vld [vmem:[#allocation2 + $0x38] sm:$0xff]
    %v78 = vld [vmem:[#allocation2 + $0x40] sm:$0xff]
    %v79 = vld [vmem:[#allocation2 + $0x48] sm:$0xff]
    %v80 = vld [vmem:[#allocation2 + $0x50] sm:$0xff]
    %v81 = vld [vmem:[#allocation2 + $0x58] sm:$0xff]
    %v82 = vld [vmem:[#allocation2 + $0x60] sm:$0xff]
    %v83 = vld [vmem:[#allocation2 + $0x68] sm:$0xff]
    %v84 = vld [vmem:[#allocation2 + $0x70] sm:$0xff]
    %v85 = vld [vmem:[#allocation2 + $0x78] sm:$0xff]
    %v86 = vld [vmem:[#allocation2 + $0x80] sm:$0xff]
    %v87 = vld [vmem:[#allocation2 + $0x88] sm:$0xff]
    %v88 = vld [vmem:[#allocation2 + $0x90] sm:$0xff]
    %v89 = vld [vmem:[#allocation2 + $0x98] sm:$0xff]
    %v90 = vld [vmem:[#allocation2 + $0xa0] sm:$0xff]
    %v91 = vld [vmem:[#allocation2 + $0xa8] sm:$0xff]
    %v92 = vld [vmem:[#allocation2 + $0xb0] sm:$0xff]
    %v93 = vld [vmem:[#allocation2 + $0xb8] sm:$0xff]
    %v94 = vld [vmem:[#allocation2 + $0xc0] sm:$0xff]
    %v95 = vld [vmem:[#allocation2 + $0xc8] sm:$0xff]
    %v96 = vld [vmem:[#allocation2 + $0xd0] sm:$0xff]
    %v97 = vld [vmem:[#allocation2 + $0xd8] sm:$0xff]
    %v98 = vld [vmem:[#allocation2 + $0xe0] sm:$0xff]
    %v99 = vld [vmem:[#allocation2 + $0xe8] sm:$0xff]
    %v100 = vld [vmem:[#allocation2 + $0xf0] sm:$0xff]
    %v101 = vld [vmem:[#allocation2 + $0xf8] sm:$0xff]
    %v102 = vld [vmem:[%s2] sm:$0x3]
    %v104 = vlaneseq
    %v105 = vshrl.u32 %v104, 7
    %v106 = vsub.s32 0, %v105
    %v107 = vrot.slane %v102, %v106
    %v108 = vlaneseq
    %v109 = vshrl.u32 %v108, 7
    %v110 = vsub.s32 1, %v109
    %v111 = vrot.slane %v102, %v110
    %v146 = vunpack.c.l.b16 %v70
    %v147 = vunpack.c.h.b16 %v70
    %v148 = vunpack.c.l.b16 %v71
    %v149 = vunpack.c.h.b16 %v71
    %v150 = vunpack.c.l.b16 %v72
    %v151 = vunpack.c.h.b16 %v72
    %v152 = vunpack.c.l.b16 %v73
    %v153 = vunpack.c.h.b16 %v73
    %v154 = vunpack.c.l.b16 %v74
    %v155 = vunpack.c.h.b16 %v74
    %v156 = vunpack.c.l.b16 %v75
    %v157 = vunpack.c.h.b16 %v75
    %v158 = vunpack.c.l.b16 %v76
    %v159 = vunpack.c.h.b16 %v76
    %v160 = vunpack.c.l.b16 %v77
    %v161 = vunpack.c.h.b16 %v77
    %v162 = vunpack.c.l.b16 %v78
    %v163 = vunpack.c.h.b16 %v78
    %v164 = vunpack.c.l.b16 %v79
    %v165 = vunpack.c.h.b16 %v79
    %v166 = vunpack.c.l.b16 %v80
    %v167 = vunpack.c.h.b16 %v80
    %v168 = vunpack.c.l.b16 %v81
    %v169 = vunpack.c.h.b16 %v81
    %v170 = vunpack.c.l.b16 %v82
    %v171 = vunpack.c.h.b16 %v82
    %v172 = vunpack.c.l.b16 %v83
    %v173 = vunpack.c.h.b16 %v83
    %v174 = vunpack.c.l.b16 %v84
    %v175 = vunpack.c.h.b16 %v84
    %v176 = vunpack.c.l.b16 %v85
    %v177 = vunpack.c.h.b16 %v85
    %v178 = vunpack.c.l.b16 %v86
    %v179 = vunpack.c.h.b16 %v86
    %v180 = vunpack.c.l.b16 %v87
    %v181 = vunpack.c.h.b16 %v87
    %v182 = vunpack.c.l.b16 %v88
    %v183 = vunpack.c.h.b16 %v88
    %v184 = vunpack.c.l.b16 %v89
    %v185 = vunpack.c.h.b16 %v89
    %v186 = vunpack.c.l.b16 %v90
    %v187 = vunpack.c.h.b16 %v90
    %v188 = vunpack.c.l.b16 %v91
    %v189 = vunpack.c.h.b16 %v91
    %v190 = vunpack.c.l.b16 %v92
    %v191 = vunpack.c.h.b16 %v92
    %v192 = vunpack.c.l.b16 %v93
    %v193 = vunpack.c.h.b16 %v93
    %v194 = vunpack.c.l.b16 %v94
    %v195 = vunpack.c.h.b16 %v94
    %v196 = vunpack.c.l.b16 %v95
    %v197 = vunpack.c.h.b16 %v95
    %v198 = vunpack.c.l.b16 %v96
    %v199 = vunpack.c.h.b16 %v96
    %v200 = vunpack.c.l.b16 %v97
    %v201 = vunpack.c.h.b16 %v97
    %v202 = vunpack.c.l.b16 %v98
    %v203 = vunpack.c.h.b16 %v98
    %v204 = vunpack.c.l.b16 %v99
    %v205 = vunpack.c.h.b16 %v99
    %v206 = vunpack.c.l.b16 %v100
    %v207 = vunpack.c.h.b16 %v100
    %v208 = vunpack.c.l.b16 %v101
    %v209 = vunpack.c.h.b16 %v101
    %v210 = vpack.c.b16 %v148, %v146
    %v211 = vpack.c.b16 %v149, %v147
    %v212 = vpack.c.b16 %v152, %v150
    %v213 = vpack.c.b16 %v153, %v151
    %v214 = vpack.c.b16 %v156, %v154
    %v215 = vpack.c.b16 %v157, %v155
    %v216 = vpack.c.b16 %v160, %v158
    %v217 = vpack.c.b16 %v161, %v159
    %v218 = vpack.c.b16 %v164, %v162
    %v219 = vpack.c.b16 %v165, %v163
    %v220 = vpack.c.b16 %v168, %v166
    %v221 = vpack.c.b16 %v169, %v167
    %v222 = vpack.c.b16 %v172, %v170
    %v223 = vpack.c.b16 %v173, %v171
    %v224 = vpack.c.b16 %v176, %v174
    %v225 = vpack.c.b16 %v177, %v175
    %v226 = vpack.c.b16 %v180, %v178
    %v227 = vpack.c.b16 %v181, %v179
    %v228 = vpack.c.b16 %v184, %v182
    %v229 = vpack.c.b16 %v185, %v183
    %v230 = vpack.c.b16 %v188, %v186
    %v231 = vpack.c.b16 %v189, %v187
    %v232 = vpack.c.b16 %v192, %v190
    %v233 = vpack.c.b16 %v193, %v191
    %v234 = vpack.c.b16 %v196, %v194
    %v235 = vpack.c.b16 %v197, %v195
    %v236 = vpack.c.b16 %v200, %v198
    %v237 = vpack.c.b16 %v201, %v199
    %v238 = vpack.c.b16 %v204, %v202
    %v239 = vpack.c.b16 %v205, %v203
    %v240 = vpack.c.b16 %v208, %v206
    %v241 = vpack.c.b16 %v209, %v207
    %274 = vmatprep.subr.bf16.mxu0 %v211
    %275 = vmatpush1.bf16.msra.mxu0 %v210
    %276 = vmatprep.subr.bf16.mxu0 %v213
    %277 = vmatpush1.bf16.msra.mxu0 %v212
    %278 = vmatprep.subr.bf16.mxu0 %v215
    %279 = vmatpush1.bf16.msra.mxu0 %v214
    %280 = vmatprep.subr.bf16.mxu0 %v217
    %281 = vmatpush1.bf16.msra.mxu0 %v216
    %282 = vmatprep.subr.bf16.mxu0 %v219
    %283 = vmatpush1.bf16.msra.mxu0 %v218
    %284 = vmatprep.subr.bf16.mxu0 %v221
    %285 = vmatpush1.bf16.msra.mxu0 %v220
    %286 = vmatprep.subr.bf16.mxu0 %v223
    %287 = vmatpush1.bf16.msra.mxu0 %v222
    %288 = vmatprep.subr.bf16.mxu0 %v225
    %289 = vmatpush1.bf16.msra.mxu0 %v224
    %290 = vmatprep.subr.bf16.mxu0 %v227
    %291 = vmatpush1.bf16.msra.mxu0 %v226
    %292 = vmatprep.subr.bf16.mxu0 %v229
    %293 = vmatpush1.bf16.msra.mxu0 %v228
    %294 = vmatprep.subr.bf16.mxu0 %v231
    %295 = vmatpush1.bf16.msra.mxu0 %v230
    %296 = vmatprep.subr.bf16.mxu0 %v233
    %297 = vmatpush1.bf16.msra.mxu0 %v232
    %298 = vmatprep.subr.bf16.mxu0 %v235
    %299 = vmatpush1.bf16.msra.mxu0 %v234
    %300 = vmatprep.subr.bf16.mxu0 %v237
    %301 = vmatpush1.bf16.msra.mxu0 %v236
    %302 = vmatprep.subr.bf16.mxu0 %v239
    %303 = vmatpush1.bf16.msra.mxu0 %v238
    %304 = vmatprep.subr.bf16.mxu0 %v241
    %305 = vmatpush1.bf16.msra.mxu0 %v240
    %306 = vmatprep.mubr.bf16.mxu0 %v69
    %307 = vmatmul.mubr.bf16.gmra.mrb[0].mxu0 %v68
    %v308 = vpop.f32.mrb[0].mxu0
    %v309 = vadd.f32 %v107, %v308
    %v310 = vpop.f32.mrb[0].mxu0
    %v311 = vadd.f32 %v111, %v310
    %v312 = vpop.f32.mrb[0].mxu0
    %v313 = vpop.f32.mrb[0].mxu0
    %314 = vdwg.mxu0
    %v315 = vmul.f32 %v309, 0.01
    %v316 = vmul.f32 %v311, 0.01
    %v317 = vmax.f32 %v309, %v315
    %v318 = vmax.f32 %v311, %v316
    %v319 = vpack.c.bf16 %v317, %v317
    %v320 = vpack.c.bf16 %v318, %v318
    %v321 = vld [vmem:[#allocation5] sm:$0xf]
    %v322 = vld [vmem:[#allocation5 + $0x4] sm:$0xf]
    %v323 = vld [vmem:[#allocation5 + $0x8] sm:$0xf]
    %v324 = vld [vmem:[#allocation5 + $0xc] sm:$0xf]
    %v325 = vld [vmem:[#allocation5 + $0x10] sm:$0xf]
    %v326 = vld [vmem:[#allocation5 + $0x14] sm:$0xf]
    %v327 = vld [vmem:[#allocation5 + $0x18] sm:$0xf]
    %v328 = vld [vmem:[#allocation5 + $0x1c] sm:$0xf]
    %v329 = vld [vmem:[#allocation5 + $0x20] sm:$0xf]
    %v330 = vld [vmem:[#allocation5 + $0x24] sm:$0xf]
    %v331 = vld [vmem:[#allocation5 + $0x28] sm:$0xf]
    %v332 = vld [vmem:[#allocation5 + $0x2c] sm:$0xf]
    %v333 = vld [vmem:[#allocation5 + $0x30] sm:$0xf]
    %v334 = vld [vmem:[#allocation5 + $0x34] sm:$0xf]
    %v335 = vld [vmem:[#allocation5 + $0x38] sm:$0xf]
    %v336 = vld [vmem:[#allocation5 + $0x3c] sm:$0xf]
    %v337 = vld [vmem:[#allocation5 + $0x40] sm:$0xf]
    %v338 = vld [vmem:[#allocation5 + $0x44] sm:$0xf]
    %v339 = vld [vmem:[#allocation5 + $0x48] sm:$0xf]
    %v340 = vld [vmem:[#allocation5 + $0x4c] sm:$0xf]
    %v341 = vld [vmem:[#allocation5 + $0x50] sm:$0xf]
    %v342 = vld [vmem:[#allocation5 + $0x54] sm:$0xf]
    %v343 = vld [vmem:[#allocation5 + $0x58] sm:$0xf]
    %v344 = vld [vmem:[#allocation5 + $0x5c] sm:$0xf]
    %v345 = vld [vmem:[#allocation5 + $0x60] sm:$0xf]
    %v346 = vld [vmem:[#allocation5 + $0x64] sm:$0xf]
    %v347 = vld [vmem:[#allocation5 + $0x68] sm:$0xf]
    %v348 = vld [vmem:[#allocation5 + $0x6c] sm:$0xf]
    %v349 = vld [vmem:[#allocation5 + $0x70] sm:$0xf]
    %v350 = vld [vmem:[#allocation5 + $0x74] sm:$0xf]
    %v351 = vld [vmem:[#allocation5 + $0x78] sm:$0xf]
    %v352 = vld [vmem:[#allocation5 + $0x7c] sm:$0xf]
    %v353 = vld [vmem:[%s4] sm:$0x1]
    %v355 = vlaneseq
    %v356 = vshrl.u32 %v355, 7
    %v357 = vsub.s32 0, %v356
    %v358 = vrot.slane %v353, %v357
    %v392 = vunpack.c.l.b16 %v321
    %v393 = vunpack.c.l.b16 %v322
    %v394 = vunpack.c.l.b16 %v323
    %v395 = vunpack.c.l.b16 %v324
    %v396 = vunpack.c.l.b16 %v325
    %v397 = vunpack.c.l.b16 %v326
    %v398 = vunpack.c.l.b16 %v327
    %v399 = vunpack.c.l.b16 %v328
    %v400 = vunpack.c.l.b16 %v329
    %v401 = vunpack.c.l.b16 %v330
    %v402 = vunpack.c.l.b16 %v331
    %v403 = vunpack.c.l.b16 %v332
    %v404 = vunpack.c.l.b16 %v333
    %v405 = vunpack.c.l.b16 %v334
    %v406 = vunpack.c.l.b16 %v335
    %v407 = vunpack.c.l.b16 %v336
    %v408 = vunpack.c.l.b16 %v337
    %v409 = vunpack.c.l.b16 %v338
    %v410 = vunpack.c.l.b16 %v339
    %v411 = vunpack.c.l.b16 %v340
    %v412 = vunpack.c.l.b16 %v341
    %v413 = vunpack.c.l.b16 %v342
    %v414 = vunpack.c.l.b16 %v343
    %v415 = vunpack.c.l.b16 %v344
    %v416 = vunpack.c.l.b16 %v345
    %v417 = vunpack.c.l.b16 %v346
    %v418 = vunpack.c.l.b16 %v347
    %v419 = vunpack.c.l.b16 %v348
    %v420 = vunpack.c.l.b16 %v349
    %v421 = vunpack.c.l.b16 %v350
    %v422 = vunpack.c.l.b16 %v351
    %v423 = vunpack.c.l.b16 %v352
    %v424 = vpack.c.b16 %v393, %v392
    %v425 = vpack.c.b16 %v395, %v394
    %v426 = vpack.c.b16 %v397, %v396
    %v427 = vpack.c.b16 %v399, %v398
    %v428 = vpack.c.b16 %v401, %v400
    %v429 = vpack.c.b16 %v403, %v402
    %v430 = vpack.c.b16 %v405, %v404
    %v431 = vpack.c.b16 %v407, %v406
    %v432 = vpack.c.b16 %v409, %v408
    %v433 = vpack.c.b16 %v411, %v410
    %v434 = vpack.c.b16 %v413, %v412
    %v435 = vpack.c.b16 %v415, %v414
    %v436 = vpack.c.b16 %v417, %v416
    %v437 = vpack.c.b16 %v419, %v418
    %v438 = vpack.c.b16 %v421, %v420
    %v439 = vpack.c.b16 %v423, %v422
    %456 = vmatprep.subr.bf16.mxu0 0
    %457 = vmatpush1.bf16.msra.mxu0 %v424
    %458 = vmatprep.subr.bf16.mxu0 0
    %459 = vmatpush1.bf16.msra.mxu0 %v425
    %460 = vmatprep.subr.bf16.mxu0 0
    %461 = vmatpush1.bf16.msra.mxu0 %v426
    %462 = vmatprep.subr.bf16.mxu0 0
    %463 = vmatpush1.bf16.msra.mxu0 %v427
    %464 = vmatprep.subr.bf16.mxu0 0
    %465 = vmatpush1.bf16.msra.mxu0 %v428
    %466 = vmatprep.subr.bf16.mxu0 0
    %467 = vmatpush1.bf16.msra.mxu0 %v429
    %468 = vmatprep.subr.bf16.mxu0 0
    %469 = vmatpush1.bf16.msra.mxu0 %v430
    %470 = vmatprep.subr.bf16.mxu0 0
    %471 = vmatpush1.bf16.msra.mxu0 %v431
    %472 = vmatprep.subr.bf16.mxu0 0
    %473 = vmatpush1.bf16.msra.mxu0 %v432
    %474 = vmatprep.subr.bf16.mxu0 0
    %475 = vmatpush1.bf16.msra.mxu0 %v433
    %476 = vmatprep.subr.bf16.mxu0 0
    %477 = vmatpush1.bf16.msra.mxu0 %v434
    %478 = vmatprep.subr.bf16.mxu0 0
    %479 = vmatpush1.bf16.msra.mxu0 %v435
    %480 = vmatprep.subr.bf16.mxu0 0
    %481 = vmatpush1.bf16.msra.mxu0 %v436
    %482 = vmatprep.subr.bf16.mxu0 0
    %483 = vmatpush1.bf16.msra.mxu0 %v437
    %484 = vmatprep.subr.bf16.mxu0 0
    %485 = vmatpush1.bf16.msra.mxu0 %v438
    %486 = vmatprep.subr.bf16.mxu0 0
    %487 = vmatpush1.bf16.msra.mxu0 %v439
    %488 = vmatprep.mubr.bf16.mxu0 %v320
    %489 = vmatmul.mubr.bf16.gmra.mrb[0].mxu0 %v319
    %v490 = vpop.f32.mrb[0].mxu0
    %v491 = vadd.f32 %v358, %v490
    %v492 = vpop.f32.mrb[0].mxu0
    %v493 = vpop.f32.mrb[0].mxu0
    %v494 = vpop.f32.mrb[0].mxu0
    %495 = vdwg.mxu0
    %v496 = vmul.f32 %v491, 0.01
    %v497 = vmax.f32 %v491, %v496
    %v498 = vpack.c.bf16 %v497, %v497
    %v499 = vld [vmem:[%s5] sm:$0xf]
    %v500 = vld [vmem:[%s5 + $0x4] sm:$0xf]
    %v501 = vld [vmem:[%s5 + $0x8] sm:$0xf]
    %v502 = vld [vmem:[%s5 + $0xc] sm:$0xf]
    %v503 = vld [vmem:[%s5 + $0x10] sm:$0xf]
    %v504 = vld [vmem:[%s5 + $0x14] sm:$0xf]
    %v505 = vld [vmem:[%s5 + $0x18] sm:$0xf]
    %v506 = vld [vmem:[%s5 + $0x1c] sm:$0xf]
    %v507 = vld [vmem:[%s5 + $0x20] sm:$0xf]
    %v508 = vld [vmem:[%s5 + $0x24] sm:$0xf]
    %v509 = vld [vmem:[%s5 + $0x28] sm:$0xf]
    %v510 = vld [vmem:[%s5 + $0x2c] sm:$0xf]
    %v511 = vld [vmem:[%s5 + $0x30] sm:$0xf]
    %v512 = vld [vmem:[%s5 + $0x34] sm:$0xf]
    %v513 = vld [vmem:[%s5 + $0x38] sm:$0xf]
    %v514 = vld [vmem:[%s5 + $0x3c] sm:$0xf]
    %v515 = vld [vmem:[%s6] sm:$0x1]
    %v517 = vlaneseq
    %v518 = vshrl.u32 %v517, 7
    %v519 = vsub.s32 0, %v518
    %v520 = vrot.slane %v515, %v519
    %v538 = vunpack.c.l.b16 %v499
    %v539 = vunpack.c.l.b16 %v500
    %v540 = vunpack.c.l.b16 %v501
    %v541 = vunpack.c.l.b16 %v502
    %v542 = vunpack.c.l.b16 %v503
    %v543 = vunpack.c.l.b16 %v504
    %v544 = vunpack.c.l.b16 %v505
    %v545 = vunpack.c.l.b16 %v506
    %v546 = vunpack.c.l.b16 %v507
    %v547 = vunpack.c.l.b16 %v508
    %v548 = vunpack.c.l.b16 %v509
    %v549 = vunpack.c.l.b16 %v510
    %v550 = vunpack.c.l.b16 %v511
    %v551 = vunpack.c.l.b16 %v512
    %v552 = vunpack.c.l.b16 %v513
    %v553 = vunpack.c.l.b16 %v514
    %v554 = vpack.c.b16 %v539, %v538
    %v555 = vpack.c.b16 %v541, %v540
    %v556 = vpack.c.b16 %v543, %v542
    %v557 = vpack.c.b16 %v545, %v544
    %v558 = vpack.c.b16 %v547, %v546
    %v559 = vpack.c.b16 %v549, %v548
    %v560 = vpack.c.b16 %v551, %v550
    %v561 = vpack.c.b16 %v553, %v552
    %570 = vmatprep.subr.bf16.mxu0 0
    %571 = vmatpush1.bf16.msra.mxu0 %v554
    %572 = vmatprep.subr.bf16.mxu0 0
    %573 = vmatpush1.bf16.msra.mxu0 %v555
    %574 = vmatprep.subr.bf16.mxu0 0
    %575 = vmatpush1.bf16.msra.mxu0 %v556
    %576 = vmatprep.subr.bf16.mxu0 0
    %577 = vmatpush1.bf16.msra.mxu0 %v557
    %578 = vmatprep.subr.bf16.mxu0 0
    %579 = vmatpush1.bf16.msra.mxu0 %v558
    %580 = vmatprep.subr.bf16.mxu0 0
    %581 = vmatpush1.bf16.msra.mxu0 %v559
    %582 = vmatprep.subr.bf16.mxu0 0
    %583 = vmatpush1.bf16.msra.mxu0 %v560
    %584 = vmatprep.subr.bf16.mxu0 0
    %585 = vmatpush1.bf16.msra.mxu0 %v561
    %586 = vmatprep.subr.bf16.mxu0 0
    %587 = vmatpush1.bf16.msra.mxu0 0
    %588 = vmatprep.subr.bf16.mxu0 0
    %589 = vmatpush1.bf16.msra.mxu0 0
    %590 = vmatprep.subr.bf16.mxu0 0
    %591 = vmatpush1.bf16.msra.mxu0 0
    %592 = vmatprep.subr.bf16.mxu0 0
    %593 = vmatpush1.bf16.msra.mxu0 0
    %594 = vmatprep.subr.bf16.mxu0 0
    %595 = vmatpush1.bf16.msra.mxu0 0
    %596 = vmatprep.subr.bf16.mxu0 0
    %597 = vmatpush1.bf16.msra.mxu0 0
    %598 = vmatprep.subr.bf16.mxu0 0
    %599 = vmatpush1.bf16.msra.mxu0 0
    %600 = vmatprep.subr.bf16.mxu0 0
    %601 = vmatpush1.bf16.msra.mxu0 0
    %602 = vmatprep.mubr.bf16.mxu0 0
    %603 = vmatmul.mubr.bf16.gmra.mrb[0].mxu0 %v498
    %v604 = vpop.f32.mrb[0].mxu0
    %v605 = vadd.f32 %v520, %v604
    %v606 = vpop.f32.mrb[0].mxu0
    %v607 = vpop.f32.mrb[0].mxu0
    %v608 = vpop.f32.mrb[0].mxu0
    %609 = vdwg.mxu0
    %vm610 = vcmask 9216
    %611 = vst.msk [vmem:[#allocation7] sm:$0x3] %vm610, %v605
    // Predicated region
    $region38: #{mlp_graph_forward.1} parent=1 // pred_check
      _
    $region39: #{mlp_graph_forward.1} parent=1 // pred_check_branch
      %613 = sbr.rel (0) target = $region41
    $region40: #{mlp_graph_forward.1} parent=1 // pred_region
      %s615 = ssub.s32 32, 32
      %616 = vsyncadd [#allocation4], %s615
      %s618 = sshll.u32 [#allocation7], 4
      %s619 = int_to_ptr.vmem [resolvable:$true] %s618
      %621 = dma.vmem_to_hbm [thread:$0]  %s619, 32, %s7, [#allocation4]
    $region41: #{mlp_graph_forward.1} parent=1 // pred_fallthru
      _
    // Predicated region
    $region42: #{mlp_graph_forward.1} parent=1 // pred_check
      _
    $region43: #{mlp_graph_forward.1} parent=1 // pred_check_branch
      %623 = sbr.rel (0) target = $region45
    $region44: #{mlp_graph_forward.1} parent=1 // pred_region
      %624 = dma.done [#allocation4], 32
    $region45: #{mlp_graph_forward.1} parent=1 // pred_fallthru
      _
    %625 = vsyncpa [#allocation3], 1
    %626 = vsyncpa [#allocation6], 1
    %627 = vsyncpa [#allocation4], 1

</llo_original>
